<compile_context>
chip_gen: v7x
topology: tpu7x:2x2x1
jax: 0.10.0
libtpu: 0.0.40
codegen_flags: <defaults>
</compile_context>

<pallas_src>
import functools
import math

import jax
import jax.numpy as jnp
from jax.experimental import pallas as pl
from jax.experimental.pallas import tpu as pltpu

_NEG_BIG = -1.0e30  # mask value for padded class columns (exp underflows to exactly 0)


def _round_up(v, mult):
    return -(-v // mult) * mult


def _pad2d(a, rows, cols):
    return jnp.pad(a, ((0, rows - a.shape[0]), (0, cols - a.shape[1])))


# ----------------------------------------------------------------------------------
# Kernels
# ----------------------------------------------------------------------------------
def _normalized_cos(x, w):
    """cos(x_i, w_j) on the MXU; zero-padded rows/cols stay exactly zero."""
    x_inv = 1.0 / jnp.maximum(jnp.sqrt(jnp.sum(x * x, axis=1, keepdims=True)), 1e-12)
    w_inv = 1.0 / jnp.maximum(jnp.sqrt(jnp.sum(w * w, axis=0, keepdims=True)), 1e-12)
    return jnp.dot(x * x_inv, w * w_inv,
                   preferred_element_type=jnp.float32,
                   precision=jax.lax.Precision.HIGHEST)


def _amsoftmax_eval_kernel(x_ref, w_ref, p_ref, *, n_classes):
    costh = _normalized_cos(x_ref[...], w_ref[...])                 # (tm, Cp)
    col = jax.lax.broadcasted_iota(jnp.int32, costh.shape, 1)
    z = jnp.where(col < n_classes, costh, _NEG_BIG)                 # mask padded classes
    z = z - jnp.max(z, axis=1, keepdims=True)
    e = jnp.exp(z)
    p_ref[...] = e / jnp.sum(e, axis=1, keepdims=True)


def _amsoftmax_train_kernel(x_ref, w_ref, lab_ref, logit_ref, loss_ref, *,
                            n_classes, m, s):
    costh = _normalized_cos(x_ref[...], w_ref[...])                 # (tm, Cp)
    col = jax.lax.broadcasted_iota(jnp.int32, costh.shape, 1)
    onehot = (col == lab_ref[...]).astype(jnp.float32)              # (tm, Cp)
    logits = s * (costh - m * onehot)                               # costh_m_s
    logit_ref[...] = logits
    z = jnp.where(col < n_classes, logits, _NEG_BIG)
    zmax = jnp.max(z, axis=1, keepdims=True)
    lse = zmax + jnp.log(jnp.sum(jnp.exp(z - zmax), axis=1, keepdims=True))
    loss_ref[...] = lse - jnp.sum(onehot * logits, axis=1, keepdims=True)  # per-row CE


# ----------------------------------------------------------------------------------
# Wrappers (padding / grid / BlockSpecs)
# ----------------------------------------------------------------------------------
def _padded_problem(x, w):
    B, D = x.shape
    Dw, C = w.shape
    assert D == Dw
    Dp = _round_up(D, 128)          # lane-dense feature axis
    Cp = _round_up(C, 128)          # lane-dense class axis (unmasked vst)
    Bp = _round_up(B, 8)            # sublane-aligned batch
    tm = min(128, Bp)               # batch tile (multiple of 8)
    Bp = _round_up(Bp, tm)
    xp = _pad2d(x.astype(jnp.float32), Bp, Dp)
    wp = _pad2d(w.astype(jnp.float32), Dp, Cp)
    return xp, wp, B, C, Bp, Dp, Cp, tm


def amsoftmax_eval(x, w):
    """Inference path: returns softmax(x_norm @ w_norm) of shape (B, n_classes)."""
    xp, wp, B, C, Bp, Dp, Cp, tm = _padded_problem(x, w)
    probs = pl.pallas_call(
        functools.partial(_amsoftmax_eval_kernel, n_classes=C),
        out_shape=jax.ShapeDtypeStruct((Bp, Cp), jnp.float32),
        grid_spec=pltpu.PrefetchScalarGridSpec(
            num_scalar_prefetch=0, grid=(Bp // tm,),
            in_specs=[pl.BlockSpec((tm, Dp), lambda i: (i, 0)),
                      pl.BlockSpec((Dp, Cp), lambda i: (0, 0))],
            out_specs=pl.BlockSpec((tm, Cp), lambda i: (i, 0))),
        compiler_params=pltpu.CompilerParams(dimension_semantics=("parallel",)),
    )(xp, wp)
    return probs[:B, :C]


def amsoftmax_train(x, w, labels, m=0.2, s=30.0):
    """Training path: returns (loss, prec1, prec5) like the torch module."""
    xp, wp, B, C, Bp, Dp, Cp, tm = _padded_problem(x, w)
    labp = jnp.pad(labels.astype(jnp.int32), (0, Bp - labels.shape[0])).reshape(Bp, 1)
    logits, loss_rows = pl.pallas_call(
        functools.partial(_amsoftmax_train_kernel, n_classes=C, m=float(m), s=float(s)),
        out_shape=(jax.ShapeDtypeStruct((Bp, Cp), jnp.float32),
                   jax.ShapeDtypeStruct((Bp, 1), jnp.float32)),
        grid_spec=pltpu.PrefetchScalarGridSpec(
            num_scalar_prefetch=0, grid=(Bp // tm,),
            in_specs=[pl.BlockSpec((tm, Dp), lambda i: (i, 0)),
                      pl.BlockSpec((Dp, Cp), lambda i: (0, 0)),
                      pl.BlockSpec((tm, 1), lambda i: (i, 0))],
            out_specs=(pl.BlockSpec((tm, Cp), lambda i: (i, 0)),
                       pl.BlockSpec((tm, 1), lambda i: (i, 0)))),
        compiler_params=pltpu.CompilerParams(dimension_semantics=("parallel",)),
    )(xp, wp, labp)

    loss = jnp.mean(loss_rows[:B, 0])            # CrossEntropyLoss default 'mean'
    logits = logits[:B, :C]
    # TODO(synk): torch .topk-based accuracy has no Pallas primitive; jax.lax.top_k glue.
    _, pred = jax.lax.top_k(logits, k=min(5, C))
    hit = (pred == labels[:, None])
    prec1 = 100.0 * jnp.mean(hit[:, :1].any(axis=1).astype(jnp.float32))
    prec5 = 100.0 * jnp.mean(hit.any(axis=1).astype(jnp.float32))
    return loss, prec1, prec5


# ----------------------------------------------------------------------------------
# Pure-JAX reference (for a correctness check in __main__)
# ----------------------------------------------------------------------------------
def _reference(x, w, labels, m, s, n_classes):
    xn = x / jnp.maximum(jnp.sqrt(jnp.sum(x * x, axis=1, keepdims=True)), 1e-12)
    wn = w / jnp.maximum(jnp.sqrt(jnp.sum(w * w, axis=0, keepdims=True)), 1e-12)
    costh = jnp.dot(xn, wn, precision=jax.lax.Precision.HIGHEST)
    probs = jax.nn.softmax(costh, axis=1)
    onehot = jax.nn.one_hot(labels, n_classes, dtype=jnp.float32)
    logits = s * (costh - m * onehot)
    lse = jax.scipy.special.logsumexp(logits, axis=1)
    loss = jnp.mean(lse - jnp.sum(onehot * logits, axis=1))
    return probs, loss


if __name__ == "__main__":
    in_feats, n_classes, batch = 64, 10, 16
    m_margin, scale = 0.2, 30.0

    key = jax.random.PRNGKey(0)
    kx, kw, kl = jax.random.split(key, 3)
    x = jax.random.normal(kx, (batch, in_feats), jnp.float32)
    # xavier_normal_(gain=1): std = sqrt(2 / (fan_in + fan_out))
    W = jax.random.normal(kw, (in_feats, n_classes), jnp.float32) * math.sqrt(
        2.0 / (in_feats + n_classes))
    labels = jax.random.randint(kl, (batch,), 0, n_classes, jnp.int32)

    # eval path
    probs = jax.block_until_ready(amsoftmax_eval(x, W))
    # train path
    loss, prec1, prec5 = amsoftmax_train(x, W, labels, m_margin, scale)
    loss, prec1, prec5 = jax.block_until_ready((loss, prec1, prec5))

    ref_probs, ref_loss = _reference(x, W, labels, m_margin, scale, n_classes)

    assert probs.shape == (batch, n_classes), probs.shape
    assert bool(jnp.all(jnp.isfinite(probs)))
    assert bool(jnp.allclose(jnp.sum(probs, axis=1), 1.0, atol=1e-3))
    assert bool(jnp.allclose(probs, ref_probs, atol=5e-3, rtol=5e-3))
    assert bool(jnp.isfinite(loss))
    assert bool(jnp.allclose(loss, ref_loss, atol=2e-2, rtol=2e-2))
    assert bool(jnp.isfinite(prec1)) and bool(jnp.isfinite(prec5))
    print("KERNEL_OK")
</pallas_src>

<mosaic_0001>
module attributes {stable_mosaic.version = 11 : i64} {
  func.func @_amsoftmax_eval_kernel(%arg0: i32, %arg1: memref<16x128xf32, #tpu.memory_space<vmem>>, %arg2: memref<128x128xf32, #tpu.memory_space<vmem>>, %arg3: memref<16x128xf32, #tpu.memory_space<vmem>>) attributes {dimension_semantics = [#tpu.dimension_semantics<parallel>], iteration_bounds = array<i64: 1>, scalar_prefetch = 0 : i64, scratch_operands = 0 : i64, tpu.core_type = #tpu.core_type<tc>, window_params = [{transform_indices = @transform_0, window_bounds = array<i64: 16, 128>}, {pipeline_mode = #tpu.pipeline_mode<synchronous>, transform_indices = @transform_1, window_bounds = array<i64: 128, 128>}, {transform_indices = @transform_2, window_bounds = array<i64: 16, 128>}]} {
    %c0 = arith.constant 0 : index
    %c0_0 = arith.constant 0 : index
    %0 = vector.load %arg1[%c0, %c0_0] : memref<16x128xf32, #tpu.memory_space<vmem>>, vector<16x128xf32>
    %c0_1 = arith.constant 0 : index
    %c0_2 = arith.constant 0 : index
    %1 = vector.load %arg2[%c0_1, %c0_2] : memref<128x128xf32, #tpu.memory_space<vmem>>, vector<128x128xf32>
    %2 = arith.mulf %0, %0 : vector<16x128xf32>
    %cst = arith.constant dense<0.000000e+00> : vector<16xf32>
    %3 = vector.multi_reduction <add>, %2, %cst [1] : vector<16x128xf32> to vector<16xf32>
    %4 = vector.shape_cast %3 : vector<16xf32> to vector<16x1xf32>
    %5 = math.sqrt %4 : vector<16x1xf32>
    %cst_3 = arith.constant 9.99999996E-13 : f32
    %6 = vector.broadcast %cst_3 : f32 to vector<16x1xf32>
    %7 = arith.maximumf %5, %6 : vector<16x1xf32>
    %cst_4 = arith.constant 1.000000e+00 : f32
    %8 = vector.broadcast %cst_4 : f32 to vector<16x1xf32>
    %9 = arith.divf %8, %7 : vector<16x1xf32>
    %10 = arith.mulf %1, %1 : vector<128x128xf32>
    %cst_5 = arith.constant dense<0.000000e+00> : vector<128xf32>
    %11 = vector.multi_reduction <add>, %10, %cst_5 [0] : vector<128x128xf32> to vector<128xf32>
    %12 = vector.shape_cast %11 : vector<128xf32> to vector<1x128xf32>
    %13 = math.sqrt %12 : vector<1x128xf32>
    %cst_6 = arith.constant 9.99999996E-13 : f32
    %14 = vector.broadcast %cst_6 : f32 to vector<1x128xf32>
    %15 = arith.maximumf %13, %14 : vector<1x128xf32>
    %cst_7 = arith.constant 1.000000e+00 : f32
    %16 = vector.broadcast %cst_7 : f32 to vector<1x128xf32>
    %17 = arith.divf %16, %15 : vector<1x128xf32>
    %18 = vector.broadcast %9 : vector<16x1xf32> to vector<16x128xf32>
    %19 = arith.mulf %0, %18 : vector<16x128xf32>
    %20 = vector.broadcast %17 : vector<1x128xf32> to vector<128x128xf32>
    %21 = arith.mulf %1, %20 : vector<128x128xf32>
    %cst_8 = arith.constant dense<0.000000e+00> : vector<16x128xf32>
    %22 = tpu.matmul %19, %21, %cst_8 {dimension_numbers = #tpu.dot_dimension_numbers<[1], [0], [0], [1], [0, 0, 1, 1], [], []>, precision = #tpu.contract_precision<fp32>} : vector<16x128xf32>, vector<128x128xf32>, vector<16x128xf32> -> vector<16x128xf32>
    %23 = tpu.iota {dimensions = array<i32: 1>} : vector<16x128xi32>
    %c10_i32 = arith.constant 10 : i32
    %24 = vector.broadcast %c10_i32 : i32 to vector<16x128xi32>
    %25 = arith.cmpi slt, %23, %24 : vector<16x128xi32>
    %cst_9 = arith.constant -1.000000e+30 : f32
    %26 = vector.broadcast %cst_9 : f32 to vector<16x128xf32>
    %27 = arith.select %25, %22, %26 : vector<16x128xi1>, vector<16x128xf32>
    %cst_10 = arith.constant dense<0xFF800000> : vector<16xf32>
    %28 = vector.multi_reduction <maximumf>, %27, %cst_10 [1] : vector<16x128xf32> to vector<16xf32>
    %29 = vector.shape_cast %28 : vector<16xf32> to vector<16x1xf32>
    %30 = vector.broadcast %29 : vector<16x1xf32> to vector<16x128xf32>
    %31 = arith.subf %27, %30 : vector<16x128xf32>
    %32 = math.exp %31 : vector<16x128xf32>
    %cst_11 = arith.constant dense<0.000000e+00> : vector<16xf32>
    %33 = vector.multi_reduction <add>, %32, %cst_11 [1] : vector<16x128xf32> to vector<16xf32>
    %34 = vector.shape_cast %33 : vector<16xf32> to vector<16x1xf32>
    %35 = vector.broadcast %34 : vector<16x1xf32> to vector<16x128xf32>
    %36 = arith.divf %32, %35 : vector<16x128xf32>
    %c0_12 = arith.constant 0 : index
    %c0_13 = arith.constant 0 : index
    %37 = vector.load %arg3[%c0_12, %c0_13] : memref<16x128xf32, #tpu.memory_space<vmem>>, vector<16x128xf32>
    tpu.vector_store %arg3[%c0_12, %c0_13], %36 {strides = array<i32>} : memref<16x128xf32, #tpu.memory_space<vmem>>, vector<16x128xf32>,
    return
  }
  func.func @transform_0(%arg0: i32) -> (i32, i32) {
    %c0_i32 = arith.constant 0 : i32
    %c0_i32_0 = arith.constant 0 : i32
    return %arg0, %c0_i32 : i32, i32
  }
  func.func @transform_1(%arg0: i32) -> (i32, i32) {
    %c0_i32 = arith.constant 0 : i32
    %c0_i32_0 = arith.constant 0 : i32
    %c0_i32_1 = arith.constant 0 : i32
    return %c0_i32, %c0_i32_0 : i32, i32
  }
  func.func @transform_2(%arg0: i32) -> (i32, i32) {
    %c0_i32 = arith.constant 0 : i32
    %c0_i32_0 = arith.constant 0 : i32
    return %arg0, %c0_i32 : i32, i32
  }
}

</mosaic_0001>

<llo_original>
// kernel: tpu_custom_call.1
$region0: #{tpu_custom_call.1}
  #allocation0 [shape = 'u32[]', space=smem, size = 0x4, offset = 0x4, fixed_abs, tag = 'smem constant byte address 0x4 - core index']
  #allocation1 [shape = 'u32[144,128]{1,0:T(1,128)}', space=vmem, size = 0x12000, scoped, tag = 'internal scratch']
  %s0 = inlined_call_operand.hbm [shape: f32[16,128], index: 0, kind: input, shape index: {}]
  %s1 = inlined_call_operand.hbm [shape: f32[128,128], index: 1, kind: input, shape index: {}]
  %s2 = inlined_call_operand.hbm [shape: f32[16,128], index: 2, kind: output, shape index: {}]
  %s3 = sld [smem:[#allocation0]]
  $region26: #{tpu_custom_call.1} parent=0
    _
  %s5 = ssub.s32 1, %s3
  %s6 = scalar_select 0, %s5, %s3
  $region1: #{tpu_custom_call.1} parent=0
    #allocation2 [shape = 'u8[8192]{0}', space=vmem, size = 0x2000, scoped, tag = 'input window, operand 0, single buffered']
    #allocation3 [shape = 's32[1]{0}', space=sflag, size = 0x4, scoped, tag = 'scoped memory for tpu_custom_call.1']
    #allocation4 [shape = 's32[1]{0}', space=sflag, size = 0x4, scoped, tag = 'scoped memory for tpu_custom_call.1']
    #allocation5 [shape = 'u8[65536]{0}', space=vmem, size = 0x10000, scoped, tag = 'input window, operand 1, single buffered']
    #allocation6 [shape = 's32[1]{0}', space=sflag, size = 0x4, scoped, tag = 'scoped memory for tpu_custom_call.1']
    #allocation7 [shape = 'u8[8192]{0}', space=vmem, size = 0x2000, scoped, tag = 'output window, operand 0, single buffered']
    %7 = vsyncpa [#allocation3], 0
    %8 = vsyncpa [#allocation6], 0
    %9 = vsyncpa [#allocation4], 0
    // Predicated region
    $region2: #{tpu_custom_call.1} parent=1 // pred_check
      _
    $region3: #{tpu_custom_call.1} parent=1 // pred_check_branch
      %11 = sbr.rel (0) target = $region5
    $region4: #{tpu_custom_call.1} parent=1 // pred_region
      %s13 = ssub.s32 256, 256
      %14 = vsyncadd [#allocation3], %s13
      %s15 = sshll.u32 [#allocation2], 4
      %s16 = int_to_ptr.vmem [resolvable:$true] %s15
      %21 = dma.hbm_to_vmem [thread:$0]  %s0, 256, %s16, [#allocation3], 128, 128, 8
    $region5: #{tpu_custom_call.1} parent=1 // pred_fallthru
      _
    // Predicated region
    $region6: #{tpu_custom_call.1} parent=1 // pred_check
      _
    $region7: #{tpu_custom_call.1} parent=1 // pred_check_branch
      %23 = sbr.rel (0) target = $region9
    $region8: #{tpu_custom_call.1} parent=1 // pred_region
      %s25 = ssub.s32 2048, 2048
      %26 = vsyncadd [#allocation6], %s25
      %s27 = sshll.u32 [#allocation5], 4
      %s28 = int_to_ptr.vmem [resolvable:$true] %s27
      %33 = dma.hbm_to_vmem [thread:$0]  %s1, 2048, %s28, [#allocation6], 128, 128, 8
    $region9: #{tpu_custom_call.1} parent=1 // pred_fallthru
      _
    // Predicated region
    $region10: #{tpu_custom_call.1} parent=1 // pred_check
      _
    $region11: #{tpu_custom_call.1} parent=1 // pred_check_branch
      %35 = sbr.rel (0) target = $region13
    $region12: #{tpu_custom_call.1} parent=1 // pred_region
      %36 = dma.done [#allocation3], 256
    $region13: #{tpu_custom_call.1} parent=1 // pred_fallthru
      _
    // Predicated region
    $region14: #{tpu_custom_call.1} parent=1 // pred_check
      _
    $region15: #{tpu_custom_call.1} parent=1 // pred_check_branch
      %38 = sbr.rel (0) target = $region17
    $region16: #{tpu_custom_call.1} parent=1 // pred_region
      %39 = dma.done [#allocation6], 2048
    $region17: #{tpu_custom_call.1} parent=1 // pred_fallthru
      _
    %v40 = vld [vmem:[#allocation2] sm:$0xff]
    %v41 = vld [vmem:[#allocation2 + $0x8] sm:$0xff]
    %v42 = vld [vmem:[#allocation5] sm:$0xff]
    %v43 = vld [vmem:[#allocation5 + $0x8] sm:$0xff]
    %v44 = vld [vmem:[#allocation5 + $0x10] sm:$0xff]
    %v45 = vld [vmem:[#allocation5 + $0x18] sm:$0xff]
    %v46 = vld [vmem:[#allocation5 + $0x20] sm:$0xff]
    %v47 = vld [vmem:[#allocation5 + $0x28] sm:$0xff]
    %v48 = vld [vmem:[#allocation5 + $0x30] sm:$0xff]
    %v49 = vld [vmem:[#allocation5 + $0x38] sm:$0xff]
    %v50 = vld [vmem:[#allocation5 + $0x40] sm:$0xff]
    %v51 = vld [vmem:[#allocation5 + $0x48] sm:$0xff]
    %v52 = vld [vmem:[#allocation5 + $0x50] sm:$0xff]
    %v53 = vld [vmem:[#allocation5 + $0x58] sm:$0xff]
    %v54 = vld [vmem:[#allocation5 + $0x60] sm:$0xff]
    %v55 = vld [vmem:[#allocation5 + $0x68] sm:$0xff]
    %v56 = vld [vmem:[#allocation5 + $0x70] sm:$0xff]
    %v57 = vld [vmem:[#allocation5 + $0x78] sm:$0xff]
    %v58 = vmul.f32 %v40, %v40
    %v59 = vmul.f32 %v41, %v41
    %60 = vadd.xlane.f32.xlu0 %v58
    %v61 = vpop.xlane.xlu0 %60
    %62 = vadd.xlane.f32.xlu0 %v59
    %v63 = vpop.xlane.xlu0 %62
    %v64 = vrsqrt.pop %v61
    %v65 = vmul.f32 %v61, %v64
    %vm66 = vcmp.eq.f32.partialorder %v61, inf
    %v67 = vsel %vm66, %v61, %v65
    %vm68 = vcmp.eq.f32.partialorder %v61, 0.0
    %v69 = vand.u32 %v61, 2147483648
    %v70 = vsel %vm68, %v69, %v67
    %v71 = vrsqrt.pop %v63
    %v72 = vmul.f32 %v63, %v71
    %vm73 = vcmp.eq.f32.partialorder %v63, inf
    %v74 = vsel %vm73, %v63, %v72
    %vm75 = vcmp.eq.f32.partialorder %v63, 0.0
    %v76 = vand.u32 %v63, 2147483648
    %v77 = vsel %vm75, %v76, %v74
    %v78 = vmax.f32 %v70, 1e-12
    %v79 = vmax.f32 %v77, 1e-12
    %v80 = vrcp.pop %v78
    %v81 = vmul.f32 1.0, %v80
    %v82 = vrcp.pop %v79
    %v83 = vmul.f32 1.0, %v82
    %v84 = vmul.f32 %v42, %v42
    %v85 = vmul.f32 %v43, %v43
    %v86 = vmul.f32 %v44, %v44
    %v87 = vmul.f32 %v45, %v45
    %v88 = vmul.f32 %v46, %v46
    %v89 = vmul.f32 %v47, %v47
    %v90 = vmul.f32 %v48, %v48
    %v91 = vmul.f32 %v49, %v49
    %v92 = vmul.f32 %v50, %v50
    %v93 = vmul.f32 %v51, %v51
    %v94 = vmul.f32 %v52, %v52
    %v95 = vmul.f32 %v53, %v53
    %v96 = vmul.f32 %v54, %v54
    %v97 = vmul.f32 %v55, %v55
    %v98 = vmul.f32 %v56, %v56
    %v99 = vmul.f32 %v57, %v57
    %v100 = vadd.f32 %v84, %v85
    %v101 = vadd.f32 %v100, %v86
    %v102 = vadd.f32 %v101, %v87
    %v103 = vadd.f32 %v102, %v88
    %v104 = vadd.f32 %v103, %v89
    %v105 = vadd.f32 %v104, %v90
    %v106 = vadd.f32 %v105, %v91
    %v107 = vadd.f32 %v106, %v92
    %v108 = vadd.f32 %v107, %v93
    %v109 = vadd.f32 %v108, %v94
    %v110 = vadd.f32 %v109, %v95
    %v111 = vadd.f32 %v110, %v96
    %v112 = vadd.f32 %v111, %v97
    %v113 = vadd.f32 %v112, %v98
    %v114 = vadd.f32 %v113, %v99
    %v115 = vrot.slane %v114, 4
    %v116 = vadd.f32 %v114, %v115
    %v117 = vrot.slane %v116, 2
    %v118 = vadd.f32 %v116, %v117
    %v119 = vrot.slane %v118, 1
    %v120 = vadd.f32 %v118, %v119
    %v121 = vrsqrt.pop %v120
    %v122 = vmul.f32 %v120, %v121
    %vm123 = vcmp.eq.f32.partialorder %v120, inf
    %v124 = vsel %vm123, %v120, %v122
    %vm125 = vcmp.eq.f32.partialorder %v120, 0.0
    %v126 = vand.u32 %v120, 2147483648
    %v127 = vsel %vm125, %v126, %v124
    %v128 = vmax.f32 %v127, 1e-12
    %v129 = vrcp.pop %v128
    %v130 = vmul.f32 1.0, %v129
    %v131 = vmul.f32 %v40, %v81
    %v132 = vmul.f32 %v41, %v83
    %v133 = vmul.f32 %v42, %v130
    %v134 = vmul.f32 %v43, %v130
    %v135 = vmul.f32 %v44, %v130
    %v136 = vmul.f32 %v45, %v130
    %v137 = vmul.f32 %v46, %v130
    %v138 = vmul.f32 %v47, %v130
    %v139 = vmul.f32 %v48, %v130
    %v140 = vmul.f32 %v49, %v130
    %v141 = vmul.f32 %v50, %v130
    %v142 = vmul.f32 %v51, %v130
    %v143 = vmul.f32 %v52, %v130
    %v144 = vmul.f32 %v53, %v130
    %v145 = vmul.f32 %v54, %v130
    %v146 = vmul.f32 %v55, %v130
    %v147 = vmul.f32 %v56, %v130
    %v148 = vmul.f32 %v57, %v130
    %149 = vmatprep.subr.mxu0 0.0
    %v150 = vand.u32 %v133, 4294901760
    %151 = vmatpush1.msra.mxu0 %v150
    %152 = vmatprep.subr.mxu0 0.0
    %v153 = vand.u32 %v134, 4294901760
    %154 = vmatpush1.msra.mxu0 %v153
    %155 = vmatprep.subr.mxu0 0.0
    %v156 = vand.u32 %v135, 4294901760
    %157 = vmatpush1.msra.mxu0 %v156
    %158 = vmatprep.subr.mxu0 0.0
    %v159 = vand.u32 %v136, 4294901760
    %160 = vmatpush1.msra.mxu0 %v159
    %161 = vmatprep.subr.mxu0 0.0
    %v162 = vand.u32 %v137, 4294901760
    %163 = vmatpush1.msra.mxu0 %v162
    %164 = vmatprep.subr.mxu0 0.0
    %v165 = vand.u32 %v138, 4294901760
    %166 = vmatpush1.msra.mxu0 %v165
    %167 = vmatprep.subr.mxu0 0.0
    %v168 = vand.u32 %v139, 4294901760
    %169 = vmatpush1.msra.mxu0 %v168
    %170 = vmatprep.subr.mxu0 0.0
    %v171 = vand.u32 %v140, 4294901760
    %172 = vmatpush1.msra.mxu0 %v171
    %173 = vmatprep.subr.mxu0 0.0
    %v174 = vand.u32 %v141, 4294901760
    %175 = vmatpush1.msra.mxu0 %v174
    %176 = vmatprep.subr.mxu0 0.0
    %v177 = vand.u32 %v142, 4294901760
    %178 = vmatpush1.msra.mxu0 %v177
    %179 = vmatprep.subr.mxu0 0.0
    %v180 = vand.u32 %v143, 4294901760
    %181 = vmatpush1.msra.mxu0 %v180
    %182 = vmatprep.subr.mxu0 0.0
    %v183 = vand.u32 %v144, 4294901760
    %184 = vmatpush1.msra.mxu0 %v183
    %185 = vmatprep.subr.mxu0 0.0
    %v186 = vand.u32 %v145, 4294901760
    %187 = vmatpush1.msra.mxu0 %v186
    %188 = vmatprep.subr.mxu0 0.0
    %v189 = vand.u32 %v146, 4294901760
    %190 = vmatpush1.msra.mxu0 %v189
    %191 = vmatprep.subr.mxu0 0.0
    %v192 = vand.u32 %v147, 4294901760
    %193 = vmatpush1.msra.mxu0 %v192
    %194 = vmatprep.subr.mxu0 0.0
    %v195 = vand.u32 %v148, 4294901760
    %196 = vmatpush1.msra.mxu0 %v195
    %197 = vmatprep.subr.mxu0 0.0
    %198 = vmatpush1.msra.mxu0 0.0
    %199 = vmatprep.subr.mxu0 0.0
    %200 = vmatpush1.msra.mxu0 0.0
    %201 = vmatprep.subr.mxu0 0.0
    %202 = vmatpush1.msra.mxu0 0.0
    %203 = vmatprep.subr.mxu0 0.0
    %204 = vmatpush1.msra.mxu0 0.0
    %205 = vmatprep.subr.mxu0 0.0
    %206 = vmatpush1.msra.mxu0 0.0
    %207 = vmatprep.subr.mxu0 0.0
    %208 = vmatpush1.msra.mxu0 0.0
    %209 = vmatprep.subr.mxu0 0.0
    %210 = vmatpush1.msra.mxu0 0.0
    %211 = vmatprep.subr.mxu0 0.0
    %212 = vmatpush1.msra.mxu0 0.0
    %213 = vmatprep.subr.mxu0 0.0
    %214 = vmatpush1.msra.mxu0 0.0
    %215 = vmatprep.subr.mxu0 0.0
    %216 = vmatpush1.msra.mxu0 0.0
    %217 = vmatprep.subr.mxu0 0.0
    %218 = vmatpush1.msra.mxu0 0.0
    %219 = vmatprep.subr.mxu0 0.0
    %220 = vmatpush1.msra.mxu0 0.0
    %221 = vmatprep.subr.mxu0 0.0
    %222 = vmatpush1.msra.mxu0 0.0
    %223 = vmatprep.subr.mxu0 0.0
    %224 = vmatpush1.msra.mxu0 0.0
    %225 = vmatprep.subr.mxu0 0.0
    %226 = vmatpush1.msra.mxu0 0.0
    %227 = vmatprep.subr.mxu0 0.0
    %228 = vmatpush1.msra.mxu0 0.0
    %229 = vmatprep.mubr.f32.mxu0 0.0
    %v230 = vand.u32 %v131, 4294901760
    %v231 = vsub.f32 %v131, %v230
    %v232 = vand.u32 %v231, 4294901760
    %v233 = vsub.f32 %v231, %v232
    %v234 = vand.u32 %v233, 4294901760
    %235 = vmatmul.mubr.f32.gmra.mrb[0].mxu0 %v234
    %v236 = vpop.f32.mrb[0].mxu0
    %v237 = vadd.f32 0.0, %v236
    %v238 = vpop.f32.mrb[0].mxu0
    %239 = vmatprep.mubr.f32.mxu0 0.0
    %v240 = vand.u32 %v132, 4294901760
    %v241 = vsub.f32 %v132, %v240
    %v242 = vand.u32 %v241, 4294901760
    %v243 = vsub.f32 %v241, %v242
    %v244 = vand.u32 %v243, 4294901760
    %245 = vmatmul.mubr.f32.gmra.mrb[0].mxu0 %v244
    %v246 = vpop.f32.mrb[0].mxu0
    %v247 = vadd.f32 0.0, %v246
    %v248 = vpop.f32.mrb[0].mxu0
    %249 = vdwg.mxu0
    %250 = vmatprep.subr.mxu0 0.0
    %v251 = vand.u32 %v133, 4294901760
    %v252 = vsub.f32 %v133, %v251
    %v253 = vand.u32 %v252, 4294901760
    %v254 = vsub.f32 %v252, %v253
    %v255 = vand.u32 %v254, 4294901760
    %256 = vmatpush1.msra.mxu0 %v255
    %257 = vmatprep.subr.mxu0 0.0
    %v258 = vand.u32 %v134, 4294901760
    %v259 = vsub.f32 %v134, %v258
    %v260 = vand.u32 %v259, 4294901760
    %v261 = vsub.f32 %v259, %v260
    %v262 = vand.u32 %v261, 4294901760
    %263 = vmatpush1.msra.mxu0 %v262
    %264 = vmatprep.subr.mxu0 0.0
    %v265 = vand.u32 %v135, 4294901760
    %v266 = vsub.f32 %v135, %v265
    %v267 = vand.u32 %v266, 4294901760
    %v268 = vsub.f32 %v266, %v267
    %v269 = vand.u32 %v268, 4294901760
    %270 = vmatpush1.msra.mxu0 %v269
    %271 = vmatprep.subr.mxu0 0.0
    %v272 = vand.u32 %v136, 4294901760
    %v273 = vsub.f32 %v136, %v272
    %v274 = vand.u32 %v273, 4294901760
    %v275 = vsub.f32 %v273, %v274
    %v276 = vand.u32 %v275, 4294901760
    %277 = vmatpush1.msra.mxu0 %v276
    %278 = vmatprep.subr.mxu0 0.0
    %v279 = vand.u32 %v137, 4294901760
    %v280 = vsub.f32 %v137, %v279
    %v281 = vand.u32 %v280, 4294901760
    %v282 = vsub.f32 %v280, %v281
    %v283 = vand.u32 %v282, 4294901760
    %284 = vmatpush1.msra.mxu0 %v283
    %285 = vmatprep.subr.mxu0 0.0
    %v286 = vand.u32 %v138, 4294901760
    %v287 = vsub.f32 %v138, %v286
    %v288 = vand.u32 %v287, 4294901760
    %v289 = vsub.f32 %v287, %v288
    %v290 = vand.u32 %v289, 4294901760
    %291 = vmatpush1.msra.mxu0 %v290
    %292 = vmatprep.subr.mxu0 0.0
    %v293 = vand.u32 %v139, 4294901760
    %v294 = vsub.f32 %v139, %v293
    %v295 = vand.u32 %v294, 4294901760
    %v296 = vsub.f32 %v294, %v295
    %v297 = vand.u32 %v296, 4294901760
    %298 = vmatpush1.msra.mxu0 %v297
    %299 = vmatprep.subr.mxu0 0.0
    %v300 = vand.u32 %v140, 4294901760
    %v301 = vsub.f32 %v140, %v300
    %v302 = vand.u32 %v301, 4294901760
    %v303 = vsub.f32 %v301, %v302
    %v304 = vand.u32 %v303, 4294901760
    %305 = vmatpush1.msra.mxu0 %v304
    %306 = vmatprep.subr.mxu0 0.0
    %v307 = vand.u32 %v141, 4294901760
    %v308 = vsub.f32 %v141, %v307
    %v309 = vand.u32 %v308, 4294901760
    %v310 = vsub.f32 %v308, %v309
    %v311 = vand.u32 %v310, 4294901760
    %312 = vmatpush1.msra.mxu0 %v311
    %313 = vmatprep.subr.mxu0 0.0
    %v314 = vand.u32 %v142, 4294901760
    %v315 = vsub.f32 %v142, %v314
    %v316 = vand.u32 %v315, 4294901760
    %v317 = vsub.f32 %v315, %v316
    %v318 = vand.u32 %v317, 4294901760
    %319 = vmatpush1.msra.mxu0 %v318
    %320 = vmatprep.subr.mxu0 0.0
    %v321 = vand.u32 %v143, 4294901760
    %v322 = vsub.f32 %v143, %v321
    %v323 = vand.u32 %v322, 4294901760
    %v324 = vsub.f32 %v322, %v323
    %v325 = vand.u32 %v324, 4294901760
    %326 = vmatpush1.msra.mxu0 %v325
    %327 = vmatprep.subr.mxu0 0.0
    %v328 = vand.u32 %v144, 4294901760
    %v329 = vsub.f32 %v144, %v328
    %v330 = vand.u32 %v329, 4294901760
    %v331 = vsub.f32 %v329, %v330
    %v332 = vand.u32 %v331, 4294901760
    %333 = vmatpush1.msra.mxu0 %v332
    %334 = vmatprep.subr.mxu0 0.0
    %v335 = vand.u32 %v145, 4294901760
    %v336 = vsub.f32 %v145, %v335
    %v337 = vand.u32 %v336, 4294901760
    %v338 = vsub.f32 %v336, %v337
    %v339 = vand.u32 %v338, 4294901760
    %340 = vmatpush1.msra.mxu0 %v339
    %341 = vmatprep.subr.mxu0 0.0
    %v342 = vand.u32 %v146, 4294901760
    %v343 = vsub.f32 %v146, %v342
    %v344 = vand.u32 %v343, 4294901760
    %v345 = vsub.f32 %v343, %v344
    %v346 = vand.u32 %v345, 4294901760
    %347 = vmatpush1.msra.mxu0 %v346
    %348 = vmatprep.subr.mxu0 0.0
    %v349 = vand.u32 %v147, 4294901760
    %v350 = vsub.f32 %v147, %v349
    %v351 = vand.u32 %v350, 4294901760
    %v352 = vsub.f32 %v350, %v351
    %v353 = vand.u32 %v352, 4294901760
    %354 = vmatpush1.msra.mxu0 %v353
    %355 = vmatprep.subr.mxu0 0.0
    %v356 = vand.u32 %v148, 4294901760
    %v357 = vsub.f32 %v148, %v356
    %v358 = vand.u32 %v357, 4294901760
    %v359 = vsub.f32 %v357, %v358
    %v360 = vand.u32 %v359, 4294901760
    %361 = vmatpush1.msra.mxu0 %v360
    %362 = vmatprep.subr.mxu0 0.0
    %363 = vmatpush1.msra.mxu0 0.0
    %364 = vmatprep.subr.mxu0 0.0
    %365 = vmatpush1.msra.mxu0 0.0
    %366 = vmatprep.subr.mxu0 0.0
    %367 = vmatpush1.msra.mxu0 0.0
    %368 = vmatprep.subr.mxu0 0.0
    %369 = vmatpush1.msra.mxu0 0.0
    %370 = vmatprep.subr.mxu0 0.0
    %371 = vmatpush1.msra.mxu0 0.0
    %372 = vmatprep.subr.mxu0 0.0
    %373 = vmatpush1.msra.mxu0 0.0
    %374 = vmatprep.subr.mxu0 0.0
    %375 = vmatpush1.msra.mxu0 0.0
    %376 = vmatprep.subr.mxu0 0.0
    %377 = vmatpush1.msra.mxu0 0.0
    %378 = vmatprep.subr.mxu0 0.0
    %379 = vmatpush1.msra.mxu0 0.0
    %380 = vmatprep.subr.mxu0 0.0
    %381 = vmatpush1.msra.mxu0 0.0
    %382 = vmatprep.subr.mxu0 0.0
    %383 = vmatpush1.msra.mxu0 0.0
    %384 = vmatprep.subr.mxu0 0.0
    %385 = vmatpush1.msra.mxu0 0.0
    %386 = vmatprep.subr.mxu0 0.0
    %387 = vmatpush1.msra.mxu0 0.0
    %388 = vmatprep.subr.mxu0 0.0
    %389 = vmatpush1.msra.mxu0 0.0
    %390 = vmatprep.subr.mxu0 0.0
    %391 = vmatpush1.msra.mxu0 0.0
    %392 = vmatprep.subr.mxu0 0.0
    %393 = vmatpush1.msra.mxu0 0.0
    %394 = vmatprep.mubr.f32.mxu0 0.0
    %v395 = vand.u32 %v131, 4294901760
    %396 = vmatmul.mubr.f32.gmra.mrb[0].mxu0 %v395
    %v397 = vpop.f32.mrb[0].mxu0
    %v398 = vadd.f32 %v237, %v397
    %v399 = vpop.f32.mrb[0].mxu0
    %400 = vmatprep.mubr.f32.mxu0 0.0
    %v401 = vand.u32 %v132, 4294901760
    %402 = vmatmul.mubr.f32.gmra.mrb[0].mxu0 %v401
    %v403 = vpop.f32.mrb[0].mxu0
    %v404 = vadd.f32 %v247, %v403
    %v405 = vpop.f32.mrb[0].mxu0
    %406 = vdwg.mxu0
    %407 = vmatprep.subr.mxu0 0.0
    %v408 = vand.u32 %v133, 4294901760
    %v409 = vsub.f32 %v133, %v408
    %410 = vmatpush1.msra.mxu0 %v409
    %411 = vmatprep.subr.mxu0 0.0
    %v412 = vand.u32 %v134, 4294901760
    %v413 = vsub.f32 %v134, %v412
    %414 = vmatpush1.msra.mxu0 %v413
    %415 = vmatprep.subr.mxu0 0.0
    %v416 = vand.u32 %v135, 4294901760
    %v417 = vsub.f32 %v135, %v416
    %418 = vmatpush1.msra.mxu0 %v417
    %419 = vmatprep.subr.mxu0 0.0
    %v420 = vand.u32 %v136, 4294901760
    %v421 = vsub.f32 %v136, %v420
    %422 = vmatpush1.msra.mxu0 %v421
    %423 = vmatprep.subr.mxu0 0.0
    %v424 = vand.u32 %v137, 4294901760
    %v425 = vsub.f32 %v137, %v424
    %426 = vmatpush1.msra.mxu0 %v425
    %427 = vmatprep.subr.mxu0 0.0
    %v428 = vand.u32 %v138, 4294901760
    %v429 = vsub.f32 %v138, %v428
    %430 = vmatpush1.msra.mxu0 %v429
    %431 = vmatprep.subr.mxu0 0.0
    %v432 = vand.u32 %v139, 4294901760
    %v433 = vsub.f32 %v139, %v432
    %434 = vmatpush1.msra.mxu0 %v433
    %435 = vmatprep.subr.mxu0 0.0
    %v436 = vand.u32 %v140, 4294901760
    %v437 = vsub.f32 %v140, %v436
    %438 = vmatpush1.msra.mxu0 %v437
    %439 = vmatprep.subr.mxu0 0.0
    %v440 = vand.u32 %v141, 4294901760
    %v441 = vsub.f32 %v141, %v440
    %442 = vmatpush1.msra.mxu0 %v441
    %443 = vmatprep.subr.mxu0 0.0
    %v444 = vand.u32 %v142, 4294901760
    %v445 = vsub.f32 %v142, %v444
    %446 = vmatpush1.msra.mxu0 %v445
    %447 = vmatprep.subr.mxu0 0.0
    %v448 = vand.u32 %v143, 4294901760
    %v449 = vsub.f32 %v143, %v448
    %450 = vmatpush1.msra.mxu0 %v449
    %451 = vmatprep.subr.mxu0 0.0
    %v452 = vand.u32 %v144, 4294901760
    %v453 = vsub.f32 %v144, %v452
    %454 = vmatpush1.msra.mxu0 %v453
    %455 = vmatprep.subr.mxu0 0.0
    %v456 = vand.u32 %v145, 4294901760
    %v457 = vsub.f32 %v145, %v456
    %458 = vmatpush1.msra.mxu0 %v457
    %459 = vmatprep.subr.mxu0 0.0
    %v460 = vand.u32 %v146, 4294901760
    %v461 = vsub.f32 %v146, %v460
    %462 = vmatpush1.msra.mxu0 %v461
    %463 = vmatprep.subr.mxu0 0.0
    %v464 = vand.u32 %v147, 4294901760
    %v465 = vsub.f32 %v147, %v464
    %466 = vmatpush1.msra.mxu0 %v465
    %467 = vmatprep.subr.mxu0 0.0
    %v468 = vand.u32 %v148, 4294901760
    %v469 = vsub.f32 %v148, %v468
    %470 = vmatpush1.msra.mxu0 %v469
    %471 = vmatprep.subr.mxu0 0.0
    %472 = vmatpush1.msra.mxu0 0.0
    %473 = vmatprep.subr.mxu0 0.0
    %474 = vmatpush1.msra.mxu0 0.0
    %475 = vmatprep.subr.mxu0 0.0
    %476 = vmatpush1.msra.mxu0 0.0
    %477 = vmatprep.subr.mxu0 0.0
    %478 = vmatpush1.msra.mxu0 0.0
    %479 = vmatprep.subr.mxu0 0.0
    %480 = vmatpush1.msra.mxu0 0.0
    %481 = vmatprep.subr.mxu0 0.0
    %482 = vmatpush1.msra.mxu0 0.0
    %483 = vmatprep.subr.mxu0 0.0
    %484 = vmatpush1.msra.mxu0 0.0
    %485 = vmatprep.subr.mxu0 0.0
    %486 = vmatpush1.msra.mxu0 0.0
    %487 = vmatprep.subr.mxu0 0.0
    %488 = vmatpush1.msra.mxu0 0.0
    %489 = vmatprep.subr.mxu0 0.0
    %490 = vmatpush1.msra.mxu0 0.0
    %491 = vmatprep.subr.mxu0 0.0
    %492 = vmatpush1.msra.mxu0 0.0
    %493 = vmatprep.subr.mxu0 0.0
    %494 = vmatpush1.msra.mxu0 0.0
    %495 = vmatprep.subr.mxu0 0.0
    %496 = vmatpush1.msra.mxu0 0.0
    %497 = vmatprep.subr.mxu0 0.0
    %498 = vmatpush1.msra.mxu0 0.0
    %499 = vmatprep.subr.mxu0 0.0
    %500 = vmatpush1.msra.mxu0 0.0
    %501 = vmatprep.subr.mxu0 0.0
    %502 = vmatpush1.msra.mxu0 0.0
    %503 = vmatprep.mubr.f32.mxu0 0.0
    %v504 = vand.u32 %v131, 4294901760
    %v505 = vsub.f32 %v131, %v504
    %506 = vmatmul.mubr.f32.gmra.mrb[0].mxu0 %v505
    %v507 = vpop.f32.mrb[0].mxu0
    %v508 = vadd.f32 %v398, %v507
    %v509 = vpop.f32.mrb[0].mxu0
    %510 = vmatprep.mubr.f32.mxu0 0.0
    %v511 = vand.u32 %v132, 4294901760
    %v512 = vsub.f32 %v132, %v511
    %513 = vmatmul.mubr.f32.gmra.mrb[0].mxu0 %v512
    %v514 = vpop.f32.mrb[0].mxu0
    %v515 = vadd.f32 %v404, %v514
    %v516 = vpop.f32.mrb[0].mxu0
    %517 = vdwg.mxu0
    %518 = vmatprep.subr.mxu0 0.0
    %v519 = vand.u32 %v133, 4294901760
    %520 = vmatpush1.msra.mxu0 %v519
    %521 = vmatprep.subr.mxu0 0.0
    %v522 = vand.u32 %v134, 4294901760
    %523 = vmatpush1.msra.mxu0 %v522
    %524 = vmatprep.subr.mxu0 0.0
    %v525 = vand.u32 %v135, 4294901760
    %526 = vmatpush1.msra.mxu0 %v525
    %527 = vmatprep.subr.mxu0 0.0
    %v528 = vand.u32 %v136, 4294901760
    %529 = vmatpush1.msra.mxu0 %v528
    %530 = vmatprep.subr.mxu0 0.0
    %v531 = vand.u32 %v137, 4294901760
    %532 = vmatpush1.msra.mxu0 %v531
    %533 = vmatprep.subr.mxu0 0.0
    %v534 = vand.u32 %v138, 4294901760
    %535 = vmatpush1.msra.mxu0 %v534
    %536 = vmatprep.subr.mxu0 0.0
    %v537 = vand.u32 %v139, 4294901760
    %538 = vmatpush1.msra.mxu0 %v537
    %539 = vmatprep.subr.mxu0 0.0
    %v540 = vand.u32 %v140, 4294901760
    %541 = vmatpush1.msra.mxu0 %v540
    %542 = vmatprep.subr.mxu0 0.0
    %v543 = vand.u32 %v141, 4294901760
    %544 = vmatpush1.msra.mxu0 %v543
    %545 = vmatprep.subr.mxu0 0.0
    %v546 = vand.u32 %v142, 4294901760
    %547 = vmatpush1.msra.mxu0 %v546
    %548 = vmatprep.subr.mxu0 0.0
    %v549 = vand.u32 %v143, 4294901760
    %550 = vmatpush1.msra.mxu0 %v549
    %551 = vmatprep.subr.mxu0 0.0
    %v552 = vand.u32 %v144, 4294901760
    %553 = vmatpush1.msra.mxu0 %v552
    %554 = vmatprep.subr.mxu0 0.0
    %v555 = vand.u32 %v145, 4294901760
    %556 = vmatpush1.msra.mxu0 %v555
    %557 = vmatprep.subr.mxu0 0.0
    %v558 = vand.u32 %v146, 4294901760
    %559 = vmatpush1.msra.mxu0 %v558
    %560 = vmatprep.subr.mxu0 0.0
    %v561 = vand.u32 %v147, 4294901760
    %562 = vmatpush1.msra.mxu0 %v561
    %563 = vmatprep.subr.mxu0 0.0
    %v564 = vand.u32 %v148, 4294901760
    %565 = vmatpush1.msra.mxu0 %v564
    %566 = vmatprep.subr.mxu0 0.0
    %567 = vmatpush1.msra.mxu0 0.0
    %568 = vmatprep.subr.mxu0 0.0
    %569 = vmatpush1.msra.mxu0 0.0
    %570 = vmatprep.subr.mxu0 0.0
    %571 = vmatpush1.msra.mxu0 0.0
    %572 = vmatprep.subr.mxu0 0.0
    %573 = vmatpush1.msra.mxu0 0.0
    %574 = vmatprep.subr.mxu0 0.0
    %575 = vmatpush1.msra.mxu0 0.0
    %576 = vmatprep.subr.mxu0 0.0
    %577 = vmatpush1.msra.mxu0 0.0
    %578 = vmatprep.subr.mxu0 0.0
    %579 = vmatpush1.msra.mxu0 0.0
    %580 = vmatprep.subr.mxu0 0.0
    %581 = vmatpush1.msra.mxu0 0.0
    %582 = vmatprep.subr.mxu0 0.0
    %583 = vmatpush1.msra.mxu0 0.0
    %584 = vmatprep.subr.mxu0 0.0
    %585 = vmatpush1.msra.mxu0 0.0
    %586 = vmatprep.subr.mxu0 0.0
    %587 = vmatpush1.msra.mxu0 0.0
    %588 = vmatprep.subr.mxu0 0.0
    %589 = vmatpush1.msra.mxu0 0.0
    %590 = vmatprep.subr.mxu0 0.0
    %591 = vmatpush1.msra.mxu0 0.0
    %592 = vmatprep.subr.mxu0 0.0
    %593 = vmatpush1.msra.mxu0 0.0
    %594 = vmatprep.subr.mxu0 0.0
    %595 = vmatpush1.msra.mxu0 0.0
    %596 = vmatprep.subr.mxu0 0.0
    %597 = vmatpush1.msra.mxu0 0.0
    %598 = vmatprep.mubr.f32.mxu0 0.0
    %v599 = vand.u32 %v131, 4294901760
    %v600 = vsub.f32 %v131, %v599
    %v601 = vand.u32 %v600, 4294901760
    %602 = vmatmul.mubr.f32.gmra.mrb[0].mxu0 %v601
    %v603 = vpop.f32.mrb[0].mxu0
    %v604 = vadd.f32 %v508, %v603
    %v605 = vpop.f32.mrb[0].mxu0
    %606 = vmatprep.mubr.f32.mxu0 0.0
    %v607 = vand.u32 %v132, 4294901760
    %v608 = vsub.f32 %v132, %v607
    %v609 = vand.u32 %v608, 4294901760
    %610 = vmatmul.mubr.f32.gmra.mrb[0].mxu0 %v609
    %v611 = vpop.f32.mrb[0].mxu0
    %v612 = vadd.f32 %v515, %v611
    %v613 = vpop.f32.mrb[0].mxu0
    %614 = vdwg.mxu0
    %615 = vmatprep.subr.mxu0 0.0
    %v616 = vand.u32 %v133, 4294901760
    %v617 = vsub.f32 %v133, %v616
    %v618 = vand.u32 %v617, 4294901760
    %619 = vmatpush1.msra.mxu0 %v618
    %620 = vmatprep.subr.mxu0 0.0
    %v621 = vand.u32 %v134, 4294901760
    %v622 = vsub.f32 %v134, %v621
    %v623 = vand.u32 %v622, 4294901760
    %624 = vmatpush1.msra.mxu0 %v623
    %625 = vmatprep.subr.mxu0 0.0
    %v626 = vand.u32 %v135, 4294901760
    %v627 = vsub.f32 %v135, %v626
    %v628 = vand.u32 %v627, 4294901760
    %629 = vmatpush1.msra.mxu0 %v628
    %630 = vmatprep.subr.mxu0 0.0
    %v631 = vand.u32 %v136, 4294901760
    %v632 = vsub.f32 %v136, %v631
    %v633 = vand.u32 %v632, 4294901760
    %634 = vmatpush1.msra.mxu0 %v633
    %635 = vmatprep.subr.mxu0 0.0
    %v636 = vand.u32 %v137, 4294901760
    %v637 = vsub.f32 %v137, %v636
    %v638 = vand.u32 %v637, 4294901760
    %639 = vmatpush1.msra.mxu0 %v638
    %640 = vmatprep.subr.mxu0 0.0
    %v641 = vand.u32 %v138, 4294901760
    %v642 = vsub.f32 %v138, %v641
    %v643 = vand.u32 %v642, 4294901760
    %644 = vmatpush1.msra.mxu0 %v643
    %645 = vmatprep.subr.mxu0 0.0
    %v646 = vand.u32 %v139, 4294901760
    %v647 = vsub.f32 %v139, %v646
    %v648 = vand.u32 %v647, 4294901760
    %649 = vmatpush1.msra.mxu0 %v648
    %650 = vmatprep.subr.mxu0 0.0
    %v651 = vand.u32 %v140, 4294901760
    %v652 = vsub.f32 %v140, %v651
    %v653 = vand.u32 %v652, 4294901760
    %654 = vmatpush1.msra.mxu0 %v653
    %655 = vmatprep.subr.mxu0 0.0
    %v656 = vand.u32 %v141, 4294901760
    %v657 = vsub.f32 %v141, %v656
    %v658 = vand.u32 %v657, 4294901760
    %659 = vmatpush1.msra.mxu0 %v658
    %660 = vmatprep.subr.mxu0 0.0
    %v661 = vand.u32 %v142, 4294901760
    %v662 = vsub.f32 %v142, %v661
    %v663 = vand.u32 %v662, 4294901760
    %664 = vmatpush1.msra.mxu0 %v663
    %665 = vmatprep.subr.mxu0 0.0
    %v666 = vand.u32 %v143, 4294901760
    %v667 = vsub.f32 %v143, %v666
    %v668 = vand.u32 %v667, 4294901760
    %669 = vmatpush1.msra.mxu0 %v668
    %670 = vmatprep.subr.mxu0 0.0
    %v671 = vand.u32 %v144, 4294901760
    %v672 = vsub.f32 %v144, %v671
    %v673 = vand.u32 %v672, 4294901760
    %674 = vmatpush1.msra.mxu0 %v673
    %675 = vmatprep.subr.mxu0 0.0
    %v676 = vand.u32 %v145, 4294901760
    %v677 = vsub.f32 %v145, %v676
    %v678 = vand.u32 %v677, 4294901760
    %679 = vmatpush1.msra.mxu0 %v678
    %680 = vmatprep.subr.mxu0 0.0
    %v681 = vand.u32 %v146, 4294901760
    %v682 = vsub.f32 %v146, %v681
    %v683 = vand.u32 %v682, 4294901760
    %684 = vmatpush1.msra.mxu0 %v683
    %685 = vmatprep.subr.mxu0 0.0
    %v686 = vand.u32 %v147, 4294901760
    %v687 = vsub.f32 %v147, %v686
    %v688 = vand.u32 %v687, 4294901760
    %689 = vmatpush1.msra.mxu0 %v688
    %690 = vmatprep.subr.mxu0 0.0
    %v691 = vand.u32 %v148, 4294901760
    %v692 = vsub.f32 %v148, %v691
    %v693 = vand.u32 %v692, 4294901760
    %694 = vmatpush1.msra.mxu0 %v693
    %695 = vmatprep.subr.mxu0 0.0
    %696 = vmatpush1.msra.mxu0 0.0
    %697 = vmatprep.subr.mxu0 0.0
    %698 = vmatpush1.msra.mxu0 0.0
    %699 = vmatprep.subr.mxu0 0.0
    %700 = vmatpush1.msra.mxu0 0.0
    %701 = vmatprep.subr.mxu0 0.0
    %702 = vmatpush1.msra.mxu0 0.0
    %703 = vmatprep.subr.mxu0 0.0
    %704 = vmatpush1.msra.mxu0 0.0
    %705 = vmatprep.subr.mxu0 0.0
    %706 = vmatpush1.msra.mxu0 0.0
    %707 = vmatprep.subr.mxu0 0.0
    %708 = vmatpush1.msra.mxu0 0.0
    %709 = vmatprep.subr.mxu0 0.0
    %710 = vmatpush1.msra.mxu0 0.0
    %711 = vmatprep.subr.mxu0 0.0
    %712 = vmatpush1.msra.mxu0 0.0
    %713 = vmatprep.subr.mxu0 0.0
    %714 = vmatpush1.msra.mxu0 0.0
    %715 = vmatprep.subr.mxu0 0.0
    %716 = vmatpush1.msra.mxu0 0.0
    %717 = vmatprep.subr.mxu0 0.0
    %718 = vmatpush1.msra.mxu0 0.0
    %719 = vmatprep.subr.mxu0 0.0
    %720 = vmatpush1.msra.mxu0 0.0
    %721 = vmatprep.subr.mxu0 0.0
    %722 = vmatpush1.msra.mxu0 0.0
    %723 = vmatprep.subr.mxu0 0.0
    %724 = vmatpush1.msra.mxu0 0.0
    %725 = vmatprep.subr.mxu0 0.0
    %726 = vmatpush1.msra.mxu0 0.0
    %727 = vmatprep.mubr.f32.mxu0 0.0
    %v728 = vand.u32 %v131, 4294901760
    %729 = vmatmul.mubr.f32.gmra.mrb[0].mxu0 %v728
    %v730 = vpop.f32.mrb[0].mxu0
    %v731 = vadd.f32 %v604, %v730
    %v732 = vpop.f32.mrb[0].mxu0
    %733 = vmatprep.mubr.f32.mxu0 0.0
    %v734 = vand.u32 %v132, 4294901760
    %735 = vmatmul.mubr.f32.gmra.mrb[0].mxu0 %v734
    %v736 = vpop.f32.mrb[0].mxu0
    %v737 = vadd.f32 %v612, %v736
    %v738 = vpop.f32.mrb[0].mxu0
    %739 = vdwg.mxu0
    %740 = vmatprep.subr.mxu0 0.0
    %v741 = vand.u32 %v133, 4294901760
    %742 = vmatpush1.msra.mxu0 %v741
    %743 = vmatprep.subr.mxu0 0.0
    %v744 = vand.u32 %v134, 4294901760
    %745 = vmatpush1.msra.mxu0 %v744
    %746 = vmatprep.subr.mxu0 0.0
    %v747 = vand.u32 %v135, 4294901760
    %748 = vmatpush1.msra.mxu0 %v747
    %749 = vmatprep.subr.mxu0 0.0
    %v750 = vand.u32 %v136, 4294901760
    %751 = vmatpush1.msra.mxu0 %v750
    %752 = vmatprep.subr.mxu0 0.0
    %v753 = vand.u32 %v137, 4294901760
    %754 = vmatpush1.msra.mxu0 %v753
    %755 = vmatprep.subr.mxu0 0.0
    %v756 = vand.u32 %v138, 4294901760
    %757 = vmatpush1.msra.mxu0 %v756
    %758 = vmatprep.subr.mxu0 0.0
    %v759 = vand.u32 %v139, 4294901760
    %760 = vmatpush1.msra.mxu0 %v759
    %761 = vmatprep.subr.mxu0 0.0
    %v762 = vand.u32 %v140, 4294901760
    %763 = vmatpush1.msra.mxu0 %v762
    %764 = vmatprep.subr.mxu0 0.0
    %v765 = vand.u32 %v141, 4294901760
    %766 = vmatpush1.msra.mxu0 %v765
    %767 = vmatprep.subr.mxu0 0.0
    %v768 = vand.u32 %v142, 4294901760
    %769 = vmatpush1.msra.mxu0 %v768
    %770 = vmatprep.subr.mxu0 0.0
    %v771 = vand.u32 %v143, 4294901760
    %772 = vmatpush1.msra.mxu0 %v771
    %773 = vmatprep.subr.mxu0 0.0
    %v774 = vand.u32 %v144, 4294901760
    %775 = vmatpush1.msra.mxu0 %v774
    %776 = vmatprep.subr.mxu0 0.0
    %v777 = vand.u32 %v145, 4294901760
    %778 = vmatpush1.msra.mxu0 %v777
    %779 = vmatprep.subr.mxu0 0.0
    %v780 = vand.u32 %v146, 4294901760
    %781 = vmatpush1.msra.mxu0 %v780
    %782 = vmatprep.subr.mxu0 0.0
    %v783 = vand.u32 %v147, 4294901760
    %784 = vmatpush1.msra.mxu0 %v783
    %785 = vmatprep.subr.mxu0 0.0
    %v786 = vand.u32 %v148, 4294901760
    %787 = vmatpush1.msra.mxu0 %v786
    %788 = vmatprep.subr.mxu0 0.0
    %789 = vmatpush1.msra.mxu0 0.0
    %790 = vmatprep.subr.mxu0 0.0
    %791 = vmatpush1.msra.mxu0 0.0
    %792 = vmatprep.subr.mxu0 0.0
    %793 = vmatpush1.msra.mxu0 0.0
    %794 = vmatprep.subr.mxu0 0.0
    %795 = vmatpush1.msra.mxu0 0.0
    %796 = vmatprep.subr.mxu0 0.0
    %797 = vmatpush1.msra.mxu0 0.0
    %798 = vmatprep.subr.mxu0 0.0
    %799 = vmatpush1.msra.mxu0 0.0
    %800 = vmatprep.subr.mxu0 0.0
    %801 = vmatpush1.msra.mxu0 0.0
    %802 = vmatprep.subr.mxu0 0.0
    %803 = vmatpush1.msra.mxu0 0.0
    %804 = vmatprep.subr.mxu0 0.0
    %805 = vmatpush1.msra.mxu0 0.0
    %806 = vmatprep.subr.mxu0 0.0
    %807 = vmatpush1.msra.mxu0 0.0
    %808 = vmatprep.subr.mxu0 0.0
    %809 = vmatpush1.msra.mxu0 0.0
    %810 = vmatprep.subr.mxu0 0.0
    %811 = vmatpush1.msra.mxu0 0.0
    %812 = vmatprep.subr.mxu0 0.0
    %813 = vmatpush1.msra.mxu0 0.0
    %814 = vmatprep.subr.mxu0 0.0
    %815 = vmatpush1.msra.mxu0 0.0
    %816 = vmatprep.subr.mxu0 0.0
    %817 = vmatpush1.msra.mxu0 0.0
    %818 = vmatprep.subr.mxu0 0.0
    %819 = vmatpush1.msra.mxu0 0.0
    %820 = vmatprep.mubr.f32.mxu0 0.0
    %v821 = vand.u32 %v131, 4294901760
    %822 = vmatmul.mubr.f32.gmra.mrb[0].mxu0 %v821
    %v823 = vpop.f32.mrb[0].mxu0
    %v824 = vadd.f32 %v731, %v823
    %v825 = vpop.f32.mrb[0].mxu0
    %826 = vmatprep.mubr.f32.mxu0 0.0
    %v827 = vand.u32 %v132, 4294901760
    %828 = vmatmul.mubr.f32.gmra.mrb[0].mxu0 %v827
    %v829 = vpop.f32.mrb[0].mxu0
    %v830 = vadd.f32 %v737, %v829
    %v831 = vpop.f32.mrb[0].mxu0
    %832 = vdwg.mxu0
    %v833 = vlaneseq
    %v834 = vand.u32 %v833, 127
    %vm835 = vcmp.lt.s32.totalorder %v834, 10
    %v836 = vsel %vm835, %v824, -1e+30
    %v837 = vsel %vm835, %v830, -1e+30
    %838 = vmax.xlane.f32.xlu0 %v836
    %v839 = vpop.xlane.xlu0 %838
    %840 = vmax.xlane.f32.xlu0 %v837
    %v841 = vpop.xlane.xlu0 %840
    %v842 = vsub.f32 %v836, %v839
    %v843 = vsub.f32 %v837, %v841
    %v844 = vmul.f32 %v842, 1.442695
    %v845 = vpow.pop %v844
    %v846 = vmul.f32 %v843, 1.442695
    %v847 = vpow.pop %v846
    %848 = vadd.xlane.f32.xlu0 %v845
    %v849 = vpop.xlane.xlu0 %848
    %850 = vadd.xlane.f32.xlu0 %v847
    %v851 = vpop.xlane.xlu0 %850
    %v852 = vrcp.pop %v849
    %v853 = vmul.f32 %v845, %v852
    %v854 = vrcp.pop %v851
    %v855 = vmul.f32 %v847, %v854
    %856 = vst [vmem:[#allocation7] sm:$0xff] %v853
    %857 = vst [vmem:[#allocation7 + $0x8] sm:$0xff] %v855
    // Predicated region
    $region18: #{tpu_custom_call.1} parent=1 // pred_check
      _
    $region19: #{tpu_custom_call.1} parent=1 // pred_check_branch
      %859 = sbr.rel (0) target = $region21
    $region20: #{tpu_custom_call.1} parent=1 // pred_region
      %s861 = ssub.s32 256, 256
      %862 = vsyncadd [#allocation4], %s861
      %s863 = sshll.u32 [#allocation7], 4
      %s864 = int_to_ptr.vmem [resolvable:$true] %s863
      %869 = dma.vmem_to_hbm [thread:$0]  %s864, 256, %s2, [#allocation4], 128, 128, 8
    $region21: #{tpu_custom_call.1} parent=1 // pred_fallthru
      _
    // Predicated region
    $region22: #{tpu_custom_call.1} parent=1 // pred_check
      _
    $region23: #{tpu_custom_call.1} parent=1 // pred_check_branch
      %871 = sbr.rel (0) target = $region25
    $region24: #{tpu_custom_call.1} parent=1 // pred_region
      %872 = dma.done [#allocation4], 256
    $region25: #{tpu_custom_call.1} parent=1 // pred_fallthru
      _
    %873 = vsyncpa [#allocation3], 1
    %874 = vsyncpa [#allocation6], 1
    %875 = vsyncpa [#allocation4], 1

</llo_original>
